<compile_context>
chip_gen: v6e
topology: v6e:2x2x1
jax: 0.10.0
libtpu: 0.0.40
codegen_flags: <defaults>
</compile_context>

<pallas_src>
import functools

import jax
import jax.numpy as jnp
from jax.experimental import pallas as pl
from jax.experimental.pallas import tpu as pltpu


# Below this size the XLA fused elementwise path beats a pallas_call launch.
_PALLAS_MIN_N = 16384


# --------------------------------------------------------------------------- #
# Kernel
# --------------------------------------------------------------------------- #
def dprelu_kernel(lb_ref, ub_ref, lam_ref, nlb_ref, nub_ref, slb_ref, sub_ref):
    lb = lb_ref[...]      # (R, L)
    ub = ub_ref[...]      # (R, L)
    lam = lam_ref[...]    # (R, L)

    one = jnp.ones_like(lb)

    # masks as 0/1 floats (matches bool * float in the torch reference)
    mask1 = (lb >= 0.0).astype(lb.dtype)                 # lb.ge(0)
    mask2 = (ub <= 0.0).astype(lb.dtype)                 # ub.le(0)
    mask3 = one - jnp.maximum(mask1, mask2)              # ~(m1 | m2)

    # a = where(ub - lb == 0, 1, ub / (ub - lb + 1e-6))  — exact divide
    diff = ub - lb
    a = jnp.where(diff == 0.0, one, ub / (diff + 1e-6))

    # 1 / (1 + exp(lam)) — exact; the kernel is HBM-bound so EUP/VALU are free.
    sig = 1.0 / (1.0 + jnp.exp(lam))

    # concrete bounds
    nlb_ref[...] = lb * mask1 + sig * lb * mask3
    nub_ref[...] = ub * mask1 + ub * mask3

    # symbolic bounds — direct per-row stores into the (2, R, L) outputs,
    # no concatenate / sublane shuffle.
    slb_ref[0] = mask1 + sig * mask3          # lower-bound slope
    # TODO(synk): drop this plane (saves ~11% of HBM traffic) if the DeepPoly
    # consumer can take a slope-only slb with an implicit zero bias row.
    slb_ref[1] = jnp.zeros_like(lb)           # lower-bound bias (always 0)
    sub_ref[0] = mask1 + a * mask3            # upper-bound slope
    sub_ref[1] = -lb * a * mask3              # upper-bound bias


# --------------------------------------------------------------------------- #
# Tiling
# --------------------------------------------------------------------------- #
def _pick_tiling(n):
    """Choose (lanes, block_rows, rows_padded) for a sublane/lane-dense layout."""
    # lane dim: multiple of 128; wider lanes for big N keep stores lane-dense.
    if n >= (1 << 21):
        lanes = 1024
    elif n >= 4096:
        lanes = 512
    else:
        lanes = 128
    rows = ((pl.cdiv(n, lanes) + 7) // 8) * 8            # sublane multiple of 8

    if rows <= 8:
        # Trivial amount of work — single tiny block.
        return lanes, rows, rows

    # ~1 MiB (f32) per operand block; live set = 9 planes x 2 buffers ~= 18 MiB,
    # under the explicit 40 MiB vmem limit on every generation (incl. v7x 64 MiB).
    max_block_rows = max(8, ((1 << 18) // lanes // 8) * 8)

    # Always >= 2 blocks: lets the auto-pipeline overlap DMA-in/compute/DMA-out
    # and lets the "parallel" grid axis shard across both v7x TensorCores.
    num_blocks = max(2, pl.cdiv(rows, max_block_rows))
    block_rows = ((pl.cdiv(rows, num_blocks) + 7) // 8) * 8
    rows = num_blocks * block_rows
    return lanes, block_rows, rows


# --------------------------------------------------------------------------- #
# Wrapper
# --------------------------------------------------------------------------- #
def dprelu_forward(lb, ub, lam, *, force_pallas=False):
    """Pallas DPReLU forward.

    Args:
      lb, ub, lam: float32 vectors of shape (N,).
      force_pallas: run the Pallas kernel even below the tiny-N threshold.
    Returns:
      (new_lb (N,), new_ub (N,), slb (2, N), sub (2, N))
    """
    n = lb.shape[0]
    dt = lb.dtype

    if n < _PALLAS_MIN_N and not force_pallas:
        # Launch/pad overhead dominates at this size; XLA's fused path wins.
        return dprelu_ref(lb, ub, lam)

    lanes, block_rows, rows = _pick_tiling(n)
    n_pad = rows * lanes
    padded = n_pad != n
    grid = (rows // block_rows,)

    def prep(v):
        v = v.astype(dt)
        if padded:
            v = jnp.pad(v, (0, n_pad - n))            # zero-pad: math stays finite
        return v.reshape(rows, lanes)

    lb2, ub2, lam2 = prep(lb), prep(ub), prep(lam)

    vec_spec = pl.BlockSpec((block_rows, lanes), lambda i: (i, 0))
    sym_spec = pl.BlockSpec((2, block_rows, lanes), lambda i: (0, i, 0))

    out_shapes = (
        jax.ShapeDtypeStruct((rows, lanes), dt),      # new lb
        jax.ShapeDtypeStruct((rows, lanes), dt),      # new ub
        jax.ShapeDtypeStruct((2, rows, lanes), dt),   # slb (slope, 0)
        jax.ShapeDtypeStruct((2, rows, lanes), dt),   # sub (slope, bias)
    )

    nlb, nub, slb, sub = pl.pallas_call(
        dprelu_kernel,
        out_shape=out_shapes,
        grid=grid,
        in_specs=[vec_spec, vec_spec, vec_spec],
        out_specs=(vec_spec, vec_spec, sym_spec, sym_spec),
        compiler_params=pltpu.CompilerParams(
            dimension_semantics=("parallel",),
            vmem_limit_bytes=40 * 1024 * 1024,
            allow_input_fusion=[True, True, True],    # fuse pad/reshape into input DMA
        ),
        cost_estimate=pl.CostEstimate(
            flops=12 * n_pad, transcendentals=n_pad, bytes_accessed=36 * n_pad
        ),
    )(lb2, ub2, lam2)

    if padded:
        nlb = nlb.reshape(n_pad)[:n]
        nub = nub.reshape(n_pad)[:n]
        slb = slb.reshape(2, n_pad)[:, :n]
        sub = sub.reshape(2, n_pad)[:, :n]
    else:
        nlb = nlb.reshape(n)
        nub = nub.reshape(n)
        slb = slb.reshape(2, n)
        sub = sub.reshape(2, n)
    return nlb, nub, slb, sub


# --------------------------------------------------------------------------- #
# Pure-JAX reference (mirrors the PyTorch forward)
# --------------------------------------------------------------------------- #
def dprelu_ref(lb, ub, lam):
    mask1 = (lb >= 0).astype(lb.dtype)
    mask2 = (ub <= 0).astype(lb.dtype)
    mask3 = 1.0 - jnp.maximum(mask1, mask2)
    a = jnp.where(ub - lb == 0, jnp.ones_like(ub), ub / (ub - lb + 1e-6))
    sig = 1.0 / (1.0 + jnp.exp(lam))
    nlb = lb * mask1 + sig * lb * mask3
    nub = ub * mask1 + ub * mask3
    curr_slb = 1.0 * mask1 + sig * mask3
    curr_sub = 1.0 * mask1 + a * mask3
    bias = -lb * a * mask3
    slb = jnp.stack([curr_slb, jnp.zeros_like(lb)], axis=0)
    sub = jnp.stack([curr_sub, bias], axis=0)
    return nlb, nub, slb, sub


# TODO(synk): x.save() / x.is_relu bookkeeping of the DeepPoly box object is
# framework state, not tensor math; only the bound transforms are implemented.

if __name__ == "__main__":
    fwd = jax.jit(dprelu_forward, static_argnames=("force_pallas",))

    def run_and_check(in_features, seed=0, force_pallas=False):
        key = jax.random.PRNGKey(seed)
        k1, k2 = jax.random.split(key)
        r1 = jax.random.normal(k1, (in_features,), dtype=jnp.float32)
        r2 = jax.random.normal(k2, (in_features,), dtype=jnp.float32)
        lb = jnp.minimum(r1, r2)                           # lower bounds
        ub = jnp.maximum(r1, r2)                           # upper bounds (lb <= ub)
        lb = lb.at[0].set(ub[0])                           # exercise the ub-lb==0 branch
        lam = jnp.ones((in_features,), dtype=jnp.float32)  # nn.Parameter(ones(N))

        nlb, nub, slb, sub = fwd(lb, ub, lam, force_pallas=force_pallas)
        jax.block_until_ready((nlb, nub, slb, sub))

        r_nlb, r_nub, r_slb, r_sub = dprelu_ref(lb, ub, lam)
        tol = dict(rtol=1e-5, atol=1e-5)
        assert jnp.allclose(nlb, r_nlb, **tol)
        assert jnp.allclose(nub, r_nub, **tol)
        assert jnp.allclose(slb, r_slb, **tol)
        assert jnp.allclose(sub, r_sub, **tol)

    run_and_check(1024, force_pallas=True)   # exact-fit fast path (no pad/slice)
    run_and_check(1000, force_pallas=True)   # ragged path (pad + slice)
    run_and_check(8192, force_pallas=True)   # multi-block grid (pipelined / megacore)
    run_and_check(300)                       # tiny-N jnp bypass
    print("KERNEL_OK")
</pallas_src>

<mosaic_0001>
module attributes {stable_mosaic.version = 11 : i64} {
  func.func @dprelu_kernel(%arg0: i32, %arg1: memref<8x128xf32, #tpu.memory_space<vmem>>, %arg2: memref<8x128xf32, #tpu.memory_space<vmem>>, %arg3: memref<8x128xf32, #tpu.memory_space<vmem>>, %arg4: memref<8x128xf32, #tpu.memory_space<vmem>>, %arg5: memref<8x128xf32, #tpu.memory_space<vmem>>, %arg6: memref<2x8x128xf32, #tpu.memory_space<vmem>>, %arg7: memref<2x8x128xf32, #tpu.memory_space<vmem>>) attributes {dimension_semantics = [#tpu.dimension_semantics<parallel>], iteration_bounds = array<i64: 1>, scalar_prefetch = 0 : i64, scratch_operands = 0 : i64, tpu.core_type = #tpu.core_type<tc>, window_params = [{transform_indices = @transform_0, window_bounds = array<i64: 8, 128>}, {transform_indices = @transform_1, window_bounds = array<i64: 8, 128>}, {transform_indices = @transform_2, window_bounds = array<i64: 8, 128>}, {transform_indices = @transform_3, window_bounds = array<i64: 8, 128>}, {transform_indices = @transform_4, window_bounds = array<i64: 8, 128>}, {transform_indices = @transform_5, window_bounds = array<i64: 2, 8, 128>}, {transform_indices = @transform_6, window_bounds = array<i64: 2, 8, 128>}]} {
    %c0 = arith.constant 0 : index
    %c0_0 = arith.constant 0 : index
    %0 = vector.load %arg1[%c0, %c0_0] : memref<8x128xf32, #tpu.memory_space<vmem>>, vector<8x128xf32>
    %c0_1 = arith.constant 0 : index
    %c0_2 = arith.constant 0 : index
    %1 = vector.load %arg2[%c0_1, %c0_2] : memref<8x128xf32, #tpu.memory_space<vmem>>, vector<8x128xf32>
    %c0_3 = arith.constant 0 : index
    %c0_4 = arith.constant 0 : index
    %2 = vector.load %arg3[%c0_3, %c0_4] : memref<8x128xf32, #tpu.memory_space<vmem>>, vector<8x128xf32>
    %cst = arith.constant 1.000000e+00 : f32
    %3 = vector.broadcast %cst : f32 to vector<8x128xf32>
    %cst_5 = arith.constant 0.000000e+00 : f32
    %4 = vector.broadcast %cst_5 : f32 to vector<8x128xf32>
    %5 = arith.cmpf oge, %0, %4 : vector<8x128xf32>
    %6 = arith.extui %5 : vector<8x128xi1> to vector<8x128xi32>
    %7 = arith.sitofp %6 : vector<8x128xi32> to vector<8x128xf32>
    %cst_6 = arith.constant 0.000000e+00 : f32
    %8 = vector.broadcast %cst_6 : f32 to vector<8x128xf32>
    %9 = arith.cmpf ole, %1, %8 : vector<8x128xf32>
    %10 = arith.extui %9 : vector<8x128xi1> to vector<8x128xi32>
    %11 = arith.sitofp %10 : vector<8x128xi32> to vector<8x128xf32>
    %12 = arith.maximumf %7, %11 : vector<8x128xf32>
    %13 = arith.subf %3, %12 : vector<8x128xf32>
    %14 = arith.subf %1, %0 : vector<8x128xf32>
    %cst_7 = arith.constant 0.000000e+00 : f32
    %15 = vector.broadcast %cst_7 : f32 to vector<8x128xf32>
    %16 = arith.cmpf oeq, %14, %15 : vector<8x128xf32>
    %cst_8 = arith.constant 9.99999997E-7 : f32
    %17 = vector.broadcast %cst_8 : f32 to vector<8x128xf32>
    %18 = arith.addf %14, %17 : vector<8x128xf32>
    %19 = arith.divf %1, %18 : vector<8x128xf32>
    %20 = arith.select %16, %3, %19 : vector<8x128xi1>, vector<8x128xf32>
    %21 = math.exp %2 : vector<8x128xf32>
    %cst_9 = arith.constant 1.000000e+00 : f32
    %22 = vector.broadcast %cst_9 : f32 to vector<8x128xf32>
    %23 = arith.addf %22, %21 : vector<8x128xf32>
    %cst_10 = arith.constant 1.000000e+00 : f32
    %24 = vector.broadcast %cst_10 : f32 to vector<8x128xf32>
    %25 = arith.divf %24, %23 : vector<8x128xf32>
    %26 = arith.mulf %0, %7 : vector<8x128xf32>
    %27 = arith.mulf %25, %0 : vector<8x128xf32>
    %28 = arith.mulf %27, %13 : vector<8x128xf32>
    %29 = arith.addf %26, %28 : vector<8x128xf32>
    %c0_11 = arith.constant 0 : index
    %c0_12 = arith.constant 0 : index
    %30 = vector.load %arg4[%c0_11, %c0_12] : memref<8x128xf32, #tpu.memory_space<vmem>>, vector<8x128xf32>
    tpu.vector_store %arg4[%c0_11, %c0_12], %29 {strides = array<i32>} : memref<8x128xf32, #tpu.memory_space<vmem>>, vector<8x128xf32>,
    %31 = arith.mulf %1, %7 : vector<8x128xf32>
    %32 = arith.mulf %1, %13 : vector<8x128xf32>
    %33 = arith.addf %31, %32 : vector<8x128xf32>
    %c0_13 = arith.constant 0 : index
    %c0_14 = arith.constant 0 : index
    %34 = vector.load %arg5[%c0_13, %c0_14] : memref<8x128xf32, #tpu.memory_space<vmem>>, vector<8x128xf32>
    tpu.vector_store %arg5[%c0_13, %c0_14], %33 {strides = array<i32>} : memref<8x128xf32, #tpu.memory_space<vmem>>, vector<8x128xf32>,
    %35 = arith.mulf %25, %13 : vector<8x128xf32>
    %36 = arith.addf %7, %35 : vector<8x128xf32>
    %c0_15 = arith.constant 0 : index
    %c0_16 = arith.constant 0 : index
    %c0_17 = arith.constant 0 : index
    %37 = vector.load %arg6[%c0_15, %c0_16, %c0_17] : memref<2x8x128xf32, #tpu.memory_space<vmem>>, vector<1x8x128xf32>
    %38 = vector.shape_cast %37 : vector<1x8x128xf32> to vector<8x128xf32>
    %39 = vector.shape_cast %36 : vector<8x128xf32> to vector<1x8x128xf32>
    tpu.vector_store %arg6[%c0_15, %c0_16, %c0_17], %39 {strides = array<i32>} : memref<2x8x128xf32, #tpu.memory_space<vmem>>, vector<1x8x128xf32>,
    %cst_18 = arith.constant 0.000000e+00 : f32
    %40 = vector.broadcast %cst_18 : f32 to vector<8x128xf32>
    %c1 = arith.constant 1 : index
    %c0_19 = arith.constant 0 : index
    %c0_20 = arith.constant 0 : index
    %41 = vector.load %arg6[%c1, %c0_19, %c0_20] : memref<2x8x128xf32, #tpu.memory_space<vmem>>, vector<1x8x128xf32>
    %42 = vector.shape_cast %41 : vector<1x8x128xf32> to vector<8x128xf32>
    %43 = vector.shape_cast %40 : vector<8x128xf32> to vector<1x8x128xf32>
    tpu.vector_store %arg6[%c1, %c0_19, %c0_20], %43 {strides = array<i32>} : memref<2x8x128xf32, #tpu.memory_space<vmem>>, vector<1x8x128xf32>,
    %44 = arith.mulf %20, %13 : vector<8x128xf32>
    %45 = arith.addf %7, %44 : vector<8x128xf32>
    %c0_21 = arith.constant 0 : index
    %c0_22 = arith.constant 0 : index
    %c0_23 = arith.constant 0 : index
    %46 = vector.load %arg7[%c0_21, %c0_22, %c0_23] : memref<2x8x128xf32, #tpu.memory_space<vmem>>, vector<1x8x128xf32>
    %47 = vector.shape_cast %46 : vector<1x8x128xf32> to vector<8x128xf32>
    %48 = vector.shape_cast %45 : vector<8x128xf32> to vector<1x8x128xf32>
    tpu.vector_store %arg7[%c0_21, %c0_22, %c0_23], %48 {strides = array<i32>} : memref<2x8x128xf32, #tpu.memory_space<vmem>>, vector<1x8x128xf32>,
    %cst_24 = arith.constant 0.000000e+00 : f32
    %49 = vector.broadcast %cst_24 : f32 to vector<8x128xf32>
    %50 = arith.subf %49, %0 : vector<8x128xf32>
    %51 = arith.mulf %50, %20 : vector<8x128xf32>
    %52 = arith.mulf %51, %13 : vector<8x128xf32>
    %c1_25 = arith.constant 1 : index
    %c0_26 = arith.constant 0 : index
    %c0_27 = arith.constant 0 : index
    %53 = vector.load %arg7[%c1_25, %c0_26, %c0_27] : memref<2x8x128xf32, #tpu.memory_space<vmem>>, vector<1x8x128xf32>
    %54 = vector.shape_cast %53 : vector<1x8x128xf32> to vector<8x128xf32>
    %55 = vector.shape_cast %52 : vector<8x128xf32> to vector<1x8x128xf32>
    tpu.vector_store %arg7[%c1_25, %c0_26, %c0_27], %55 {strides = array<i32>} : memref<2x8x128xf32, #tpu.memory_space<vmem>>, vector<1x8x128xf32>,
    return
  }
  func.func @transform_0(%arg0: i32) -> (i32, i32) {
    %c0_i32 = arith.constant 0 : i32
    %c0_i32_0 = arith.constant 0 : i32
    return %arg0, %c0_i32 : i32, i32
  }
  func.func @transform_1(%arg0: i32) -> (i32, i32) {
    %c0_i32 = arith.constant 0 : i32
    %c0_i32_0 = arith.constant 0 : i32
    return %arg0, %c0_i32 : i32, i32
  }
  func.func @transform_2(%arg0: i32) -> (i32, i32) {
    %c0_i32 = arith.constant 0 : i32
    %c0_i32_0 = arith.constant 0 : i32
    return %arg0, %c0_i32 : i32, i32
  }
  func.func @transform_3(%arg0: i32) -> (i32, i32) {
    %c0_i32 = arith.constant 0 : i32
    %c0_i32_0 = arith.constant 0 : i32
    return %arg0, %c0_i32 : i32, i32
  }
  func.func @transform_4(%arg0: i32) -> (i32, i32) {
    %c0_i32 = arith.constant 0 : i32
    %c0_i32_0 = arith.constant 0 : i32
    return %arg0, %c0_i32 : i32, i32
  }
  func.func @transform_5(%arg0: i32) -> (i32, i32, i32) {
    %c0_i32 = arith.constant 0 : i32
    %c0_i32_0 = arith.constant 0 : i32
    %c0_i32_1 = arith.constant 0 : i32
    return %c0_i32, %arg0, %c0_i32_0 : i32, i32, i32
  }
  func.func @transform_6(%arg0: i32) -> (i32, i32, i32) {
    %c0_i32 = arith.constant 0 : i32
    %c0_i32_0 = arith.constant 0 : i32
    %c0_i32_1 = arith.constant 0 : i32
    return %c0_i32, %arg0, %c0_i32_0 : i32, i32, i32
  }
}

</mosaic_0001>

<llo_original>
// kernel: dprelu_forward.2
$region0: #{dprelu_forward.2}
  #allocation0 [shape = 'u32[]', space=smem, size = 0x4, offset = 0x4, fixed_abs, tag = 'smem constant byte address 0x4 - core index']
  #allocation1 [shape = 'u32[144,128]{1,0:T(1,128)}', space=vmem, size = 0x12000, scoped, tag = 'internal scratch']
  %s0 = inlined_call_operand.vmem [shape: f32[1024], index: 0, kind: input, shape index: {}]
  %s1 = inlined_call_operand.hbm [shape: f32[1024], index: 1, kind: input, shape index: {}]
  %s2 = inlined_call_operand.hbm [shape: f32[1024], index: 2, kind: input, shape index: {}]
  %s3 = inlined_call_operand.hbm [shape: f32[8,128], index: 3, kind: output, shape index: {0}]
  %s4 = inlined_call_operand.hbm [shape: f32[8,128], index: 4, kind: output, shape index: {1}]
  %s5 = inlined_call_operand.vmem [shape: f32[2,8,128], index: 5, kind: output, shape index: {2}]
  %s6 = inlined_call_operand.vmem [shape: f32[2,8,128], index: 6, kind: output, shape index: {3}]
  %7 = xla_tuple %s3, %s4, %s5, %s6
  %s8 = sld [smem:[#allocation0]]
  $region54: #{dprelu_forward.2} parent=0
    _
  %s10 = ssub.s32 1, %s8
  %s11 = scalar_select 0, %s10, %s8
  $region1: #{dprelu_forward.2} parent=0
    #allocation2 [shape = 'u8[4096]{0}', space=vmem, size = 0x1000, scoped, tag = 'operand span for operand 2']
    #allocation3 [shape = 's32[1]{0}', space=sflag, size = 0x4, scoped, tag = 'scoped memory for dprelu_forward.2']
    #allocation4 [shape = 's32[1]{0}', space=sflag, size = 0x4, scoped, tag = 'scoped memory for dprelu_forward.2']
    #allocation5 [shape = 'u8[4096]{0}', space=vmem, size = 0x1000, scoped, tag = 'operand span for operand 1']
    #allocation6 [shape = 's32[1]{0}', space=sflag, size = 0x4, scoped, tag = 'scoped memory for dprelu_forward.2']
    #allocation7 [shape = 'u8[4096]{0}', space=vmem, size = 0x1000, scoped, tag = 'output window, operand 0, single buffered']
    #allocation8 [shape = 'u8[4096]{0}', space=vmem, size = 0x1000, scoped, tag = 'output window, operand 1, single buffered']
    #allocation9 [shape = 's32[1]{0}', space=sflag, size = 0x4, scoped, tag = 'scoped memory for dprelu_forward.2']
    #allocation10 [shape = 'u8[4096]{0}', space=vmem, size = 0x1000, dematerialized = true, scoped, tag = 'FusionAdapter Buffer %fusion.3 = f32[8,128]{1,0:T(8,128)} fusion(%param_2.3), kind=kLoop, calls=%fused_computation.5.clone, metadata={op_name="jit(dprelu_forward)/reshape" stack_frame_id=9}']
    #allocation11 [shape = 'u8[4096]{0}', space=vmem, size = 0x1000, dematerialized = true, scoped, tag = 'FusionAdapter Buffer %fusion.2 = f32[8,128]{1,0:T(8,128)} fusion(%param_1.2), kind=kLoop, calls=%fused_computation.4.clone, metadata={op_name="jit(dprelu_forward)/reshape" stack_frame_id=11}']
    #allocation12 [shape = 'u8[4096]{0}', space=vmem, size = 0x1000, dematerialized = true, scoped, tag = 'FusionAdapter Buffer %fusion.1 = f32[8,128]{1,0:T(8,128)} fusion(%param_0.7), kind=kLoop, calls=%fused_computation.3.clone, metadata={op_name="jit(dprelu_forward)/reshape" stack_frame_id=13}']
    %12 = vsyncpa [#allocation3], 0
    %13 = vsyncpa [#allocation6], 0
    %14 = vsyncpa [#allocation4], 0
    %15 = vsyncpa [#allocation9], 0
    // Predicated region
    $region2: #{dprelu_forward.2} parent=1 // pred_check
      _
    $region3: #{dprelu_forward.2} parent=1 // pred_check_branch
      %17 = sbr.rel (0) target = $region5
    $region4: #{dprelu_forward.2} parent=1 // pred_region
      %s19 = ssub.s32 128, 128
      %20 = vsyncadd [#allocation3], %s19
      %s22 = sshll.u32 [#allocation2], 4
      %s23 = int_to_ptr.vmem [resolvable:$true] %s22
      %25 = dma.hbm_to_vmem [thread:$0]  %s2, 128, %s23, [#allocation3]
    $region5: #{dprelu_forward.2} parent=1 // pred_fallthru
      _
    // Predicated region
    $region6: #{dprelu_forward.2} parent=1 // pred_check
      _
    $region7: #{dprelu_forward.2} parent=1 // pred_check_branch
      %27 = sbr.rel (0) target = $region9
    $region8: #{dprelu_forward.2} parent=1 // pred_region
      %s29 = ssub.s32 128, 128
      %30 = vsyncadd [#allocation6], %s29
      %s32 = sshll.u32 [#allocation5], 4
      %s33 = int_to_ptr.vmem [resolvable:$true] %s32
      %35 = dma.hbm_to_vmem [thread:$0]  %s1, 128, %s33, [#allocation6]
    $region9: #{dprelu_forward.2} parent=1 // pred_fallthru
      _
    // Predicated region
    $region10: #{dprelu_forward.2} parent=1 // pred_check
      _
    $region11: #{dprelu_forward.2} parent=1 // pred_check_branch
      %37 = sbr.rel (0) target = $region13
    $region12: #{dprelu_forward.2} parent=1 // pred_region
      _
    $region13: #{dprelu_forward.2} parent=1 // pred_fallthru
      _
    // Predicated region
    $region14: #{dprelu_forward.2} parent=1 // pred_check
      _
    $region15: #{dprelu_forward.2} parent=1 // pred_check_branch
      %39 = sbr.rel (0) target = $region17
    $region16: #{dprelu_forward.2} parent=1 // pred_region
      %40 = dma.done [#allocation3], 128
    $region17: #{dprelu_forward.2} parent=1 // pred_fallthru
      _
    // Predicated region
    $region18: #{dprelu_forward.2} parent=1 // pred_check
      _
    $region19: #{dprelu_forward.2} parent=1 // pred_check_branch
      %42 = sbr.rel (0) target = $region21
    $region20: #{dprelu_forward.2} parent=1 // pred_region
      %43 = dma.done [#allocation6], 128
    $region21: #{dprelu_forward.2} parent=1 // pred_fallthru
      _
    %v44 = vld [vmem:[#allocation2] sm:$0xff]
    %s46 = ssub.s32 256, 1
    %47 = vst [vmem:[#allocation10] sm:%s46] %v44
    %v48 = vld [vmem:[#allocation5] sm:$0xff]
    %s50 = ssub.s32 256, 1
    %51 = vst [vmem:[#allocation11] sm:%s50] %v48
    %v52 = vld [vmem:[%s0] sm:$0xff]
    %s54 = ssub.s32 256, 1
    %55 = vst [vmem:[#allocation12] sm:%s54] %v52
    %v56 = vld [vmem:[#allocation10] sm:$0xff]
    %v57 = vld [vmem:[#allocation11] sm:$0xff]
    %v58 = vld [vmem:[#allocation12] sm:$0xff]
    %vm59 = vcmp.ge.f32.partialorder %v56, 0.0
    %v60 = vsel %vm59, 1, 0
    %v61 = vcvt.s32.f32 %v60
    %vm62 = vcmp.le.f32.partialorder %v57, 0.0
    %v63 = vsel %vm62, 1, 0
    %v64 = vcvt.s32.f32 %v63
    %v65 = vmax.f32 %v61, %v64
    %v66 = vsub.f32 1.0, %v65
    %v67 = vsub.f32 %v57, %v56
    %vm68 = vcmp.eq.f32.partialorder %v67, 0.0
    %v69 = vadd.f32 %v67, 1e-06
    %v70 = vrcp.pop %v69
    %v71 = vmul.f32 %v57, %v70
    %v72 = vsel %vm68, 1.0, %v71
    %v73 = vmul.f32 %v58, 1.442695
    %v74 = vpow.pop %v73
    %v75 = vadd.f32 %v74, 1.0
    %v76 = vrcp.pop %v75
    %v77 = vmul.f32 1.0, %v76
    %v78 = vmul.f32 %v56, %v61
    %v79 = vmul.f32 %v77, %v56
    %v80 = vmul.f32 %v79, %v66
    %v81 = vadd.f32 %v78, %v80
    %82 = vst [vmem:[#allocation7] sm:$0xff] %v81
    %v83 = vmul.f32 %v57, %v61
    %v84 = vmul.f32 %v57, %v66
    %v85 = vadd.f32 %v83, %v84
    %86 = vst [vmem:[#allocation8] sm:$0xff] %v85
    %v87 = vmul.f32 %v77, %v66
    %v88 = vadd.f32 %v61, %v87
    %89 = vst [vmem:[%s5] sm:$0xff] %v88
    %s90 = scalar_lea.vmem %s5, 8
    %91 = vst [vmem:[%s90] sm:$0xff] 0.0
    %v92 = vmul.f32 %v72, %v66
    %v93 = vadd.f32 %v61, %v92
    %94 = vst [vmem:[%s6] sm:$0xff] %v93
    %v95 = vsub.f32 0.0, %v56
    %v96 = vmul.f32 %v95, %v72
    %v97 = vmul.f32 %v96, %v66
    %s98 = scalar_lea.vmem %s6, 8
    %99 = vst [vmem:[%s98] sm:$0xff] %v97
    // Predicated region
    $region22: #{dprelu_forward.2} parent=1 // pred_check
      _
    $region23: #{dprelu_forward.2} parent=1 // pred_check_branch
      %101 = sbr.rel (0) target = $region25
    $region24: #{dprelu_forward.2} parent=1 // pred_region
      %s103 = ssub.s32 128, 128
      %104 = vsyncadd [#allocation4], %s103
      %s106 = sshll.u32 [#allocation7], 4
      %s107 = int_to_ptr.vmem [resolvable:$true] %s106
      %109 = dma.vmem_to_hbm [thread:$0]  %s107, 128, %s3, [#allocation4]
    $region25: #{dprelu_forward.2} parent=1 // pred_fallthru
      _
    // Predicated region
    $region26: #{dprelu_forward.2} parent=1 // pred_check
      _
    $region27: #{dprelu_forward.2} parent=1 // pred_check_branch
      %111 = sbr.rel (0) target = $region29
    $region28: #{dprelu_forward.2} parent=1 // pred_region
      %s113 = ssub.s32 128, 128
      %114 = vsyncadd [#allocation9], %s113
      %s116 = sshll.u32 [#allocation8], 4
      %s117 = int_to_ptr.vmem [resolvable:$true] %s116
      %119 = dma.vmem_to_hbm [thread:$0]  %s117, 128, %s4, [#allocation9]
    $region29: #{dprelu_forward.2} parent=1 // pred_fallthru
      _
    // Predicated region
    $region30: #{dprelu_forward.2} parent=1 // pred_check
      _
    $region31: #{dprelu_forward.2} parent=1 // pred_check_branch
      %121 = sbr.rel (0) target = $region33
    $region32: #{dprelu_forward.2} parent=1 // pred_region
      _
    $region33: #{dprelu_forward.2} parent=1 // pred_fallthru
      _
    // Predicated region
    $region34: #{dprelu_forward.2} parent=1 // pred_check
      _
    $region35: #{dprelu_forward.2} parent=1 // pred_check_branch
      %123 = sbr.rel (0) target = $region37
    $region36: #{dprelu_forward.2} parent=1 // pred_region
      _
    $region37: #{dprelu_forward.2} parent=1 // pred_fallthru
      _
    // Predicated region
    $region38: #{dprelu_forward.2} parent=1 // pred_check
      _
    $region39: #{dprelu_forward.2} parent=1 // pred_check_branch
      %125 = sbr.rel (0) target = $region41
    $region40: #{dprelu_forward.2} parent=1 // pred_region
      %126 = dma.done [#allocation4], 128
    $region41: #{dprelu_forward.2} parent=1 // pred_fallthru
      _
    // Predicated region
    $region42: #{dprelu_forward.2} parent=1 // pred_check
      _
    $region43: #{dprelu_forward.2} parent=1 // pred_check_branch
      %128 = sbr.rel (0) target = $region45
    $region44: #{dprelu_forward.2} parent=1 // pred_region
      %129 = dma.done [#allocation9], 128
    $region45: #{dprelu_forward.2} parent=1 // pred_fallthru
      _
    // Predicated region
    $region46: #{dprelu_forward.2} parent=1 // pred_check
      _
    $region47: #{dprelu_forward.2} parent=1 // pred_check_branch
      %131 = sbr.rel (0) target = $region49
    $region48: #{dprelu_forward.2} parent=1 // pred_region
      _
    $region49: #{dprelu_forward.2} parent=1 // pred_fallthru
      _
    // Predicated region
    $region50: #{dprelu_forward.2} parent=1 // pred_check
      _
    $region51: #{dprelu_forward.2} parent=1 // pred_check_branch
      %133 = sbr.rel (0) target = $region53
    $region52: #{dprelu_forward.2} parent=1 // pred_region
      _
    $region53: #{dprelu_forward.2} parent=1 // pred_fallthru
      _
    %134 = vsyncpa [#allocation3], 1
    %135 = vsyncpa [#allocation6], 1
    %136 = vsyncpa [#allocation4], 1
    %137 = vsyncpa [#allocation9], 1

</llo_original>
